<compile_context>
chip_gen: v6e
topology: v6e:2x2x1
jax: 0.10.0
libtpu: 0.0.40
codegen_flags: <defaults>
</compile_context>

<pallas_src>
import jax
import jax.numpy as jnp
from jax.experimental import pallas as pl
from jax.experimental.pallas import tpu as pltpu


# Layer dims: 4 -> 8 -> 16 -> 64 -> 16
HIDDEN_DIMS = [4, 8, 16, 64, 16]
IN_DIMS = HIDDEN_DIMS[:-1]          # [4, 8, 16, 64]
OUT_DIMS = HIDDEN_DIMS[1:]          # [8, 16, 64, 16]
# Contraction widths used in-kernel; layer-0 padded 4 -> 8 (col 4 = folded
# bias via the ones row, cols 5..7 zero).
IN_DIMS_PAD = [8, 8, 16, 64]
X_ROWS = 8                          # input sublanes: 4 features + ones row + 3 zero rows
ONES_ROW = HIDDEN_DIMS[0]           # row index 4 carries constant 1.0 (layer-0 bias fold)

# Row offsets of each layer's weight rows inside the packed slab.
ROW_OFFS = [0]
for o in OUT_DIMS:
    ROW_OFFS.append(ROW_OFFS[-1] + o)   # [0, 8, 24, 88, 104]
SLAB_ROWS = ROW_OFFS[-1]            # 104 (multiple of 8)
SLAB_COLS = 128                     # lane-padded slab width
BIAS_COL = 64                       # bias column for layers 1..3 (weights use cols < 64)

NEG_SLOPE = 0.01                    # torch.nn.LeakyReLU default
LANE = 128
# Max lanes per tile: (8 + 16) rows * 4 B = 96 B/lane; double buffered -> 6 MiB
# at 32768 lanes.  Safe under v5e's 16 MiB default scoped VMEM and v7x's 64 MiB.
TILE_MAX = 32768


def _round_up(n, m):
    return ((n + m - 1) // m) * m


def _choose_tile_b(B):
    """B-adaptive lane tile.

    Big enough to amortize the ~0.35 us per-grid-step overhead (up to TILE_MAX
    lanes), small enough to avoid padding waste for modest B, and >= 2 grid
    steps whenever possible so the "parallel" grid axis keeps both v7x
    TensorCores busy (harmless on single-TC v5e/v6e)."""
    B_pad = _round_up(max(B, 1), LANE)
    min_steps = 1 if B_pad <= LANE else 2
    n_steps = max(min_steps, pl.cdiv(B_pad, TILE_MAX))
    return _round_up(pl.cdiv(B_pad, n_steps), LANE)


def zdec_kernel(xT_ref, slab_ref, oT_ref):
    # xT_ref:  [8, tile_b]   rows 0..3 = features, row 4 = 1.0, rows 5..7 = 0
    # slab_ref:[104, 128]    packed weights (bias in col 64 for layers 1..3,
    #                        layer-0 bias folded into weight col 4); resident
    # oT_ref:  [16, tile_b]
    h = xT_ref[...]                                          # f32 [8, tile_b]
    n_layers = len(OUT_DIMS)
    for li in range(n_layers):
        r0, r1 = ROW_OFFS[li], ROW_OFFS[li + 1]
        w = slab_ref[r0:r1, 0:IN_DIMS_PAD[li]]               # [out_d, in_d] static slice
        h = jnp.dot(w, h, preferred_element_type=jnp.float32)
        if li > 0:                                           # layer-0 bias is in the matmul
            h = h + slab_ref[r0:r1, BIAS_COL:BIAS_COL + 1]
        if li < n_layers - 1:
            h = jnp.maximum(h, NEG_SLOPE * h)                # LeakyReLU(0.01), 2 VPU ops
        else:
            h = jax.nn.sigmoid(h)                            # final Sigmoid (EUP)
    oT_ref[...] = h.astype(oT_ref.dtype)


def pack_params(params):
    """Pack torch-layout (W[out,in], b[out]) pairs into one [104,128] slab."""
    slab = jnp.zeros((SLAB_ROWS, SLAB_COLS), jnp.float32)
    for li, (W, b) in enumerate(params):
        out_d, in_d = W.shape
        r0 = ROW_OFFS[li]
        slab = slab.at[r0:r0 + out_d, 0:in_d].set(W.astype(jnp.float32))
        if li == 0:
            # Layer-0 bias folded into the matmul via the constant-ones row.
            slab = slab.at[r0:r0 + out_d, ONES_ROW].set(b.astype(jnp.float32))
        else:
            slab = slab.at[r0:r0 + out_d, BIAS_COL].set(b.astype(jnp.float32))
    return slab


def prepare_xT(x, tile_b):
    """Build the lane-dense kernel input [8, B_pad]: features on sublanes,
    batch on lanes, row 4 = 1.0 (layer-0 bias), rows 5..7 zero.  Producers
    that can emit this layout directly avoid the pad/transpose HBM traffic."""
    B = x.shape[0]
    B_pad = _round_up(max(B, 1), tile_b)
    x_aug = jnp.concatenate(
        [x.astype(jnp.float32), jnp.ones((B, 1), jnp.float32)], axis=1)   # [B, 5]
    xT = jnp.zeros((X_ROWS, B_pad), jnp.float32)
    xT = xT.at[:ONES_ROW + 1, :B].set(x_aug.T)
    return xT


def zdec_block_T(xT, slab, *, tile_b):
    """Core lane-dense entry point: xT [8, B_pad] -> [16, B_pad] (same layout).
    B_pad must be a multiple of tile_b (see prepare_xT)."""
    assert xT.shape[0] == X_ROWS
    B_pad = xT.shape[1]
    assert B_pad % tile_b == 0
    grid_b = B_pad // tile_b

    cost = pl.CostEstimate(
        flops=2 * sum(i * o for i, o in zip(IN_DIMS_PAD, OUT_DIMS)) * B_pad,
        transcendentals=OUT_DIMS[-1] * B_pad,                 # sigmoid per output elem
        bytes_accessed=(X_ROWS + OUT_DIMS[-1]) * 4 * B_pad    # padded 8-row in + 16-row out
        + SLAB_ROWS * SLAB_COLS * 4,
    )

    return pl.pallas_call(
        zdec_kernel,
        out_shape=jax.ShapeDtypeStruct((OUT_DIMS[-1], B_pad), jnp.float32),
        grid=(grid_b,),
        in_specs=[
            pl.BlockSpec((X_ROWS, tile_b), lambda i: (0, i)),        # x tile (pipelined)
            # Constant index_map -> slab DMA'd once, VMEM-resident across steps.
            pl.BlockSpec((SLAB_ROWS, SLAB_COLS), lambda i: (0, 0)),
        ],
        out_specs=pl.BlockSpec((OUT_DIMS[-1], tile_b), lambda i: (0, i)),
        compiler_params=pltpu.CompilerParams(
            dimension_semantics=("parallel",),            # megacore sharding on v7x
            vmem_limit_bytes=32 * 1024 * 1024,            # v5e default is only 16 MiB
        ),
        cost_estimate=cost,
    )(xT, slab)


@jax.jit
def zdec_block(x, slab):
    """Convenience wrapper: x [B, 4] -> [B, 16].

    tile_b is derived from the static batch size at trace time.  Note the
    pad/transpose here and the final slice/transpose are separate XLA ops;
    for peak end-to-end throughput keep the lane-dense layout across the
    pipeline (use prepare_xT / zdec_block_T directly)."""
    B = x.shape[0]
    tile_b = _choose_tile_b(B)
    xT = prepare_xT(x, tile_b)
    oT = zdec_block_T(xT, slab, tile_b=tile_b)
    return oT[:, :B].T


def init_params(key):
    """Deterministic init mimicking torch.nn.Linear (uniform +-1/sqrt(fan_in)).
    Weights kept in torch layout: W [out_features, in_features], b [out]."""
    params = []
    for i in range(len(HIDDEN_DIMS) - 1):
        fan_in, fan_out = HIDDEN_DIMS[i], HIDDEN_DIMS[i + 1]
        key, kw, kb = jax.random.split(key, 3)
        bound = 1.0 / jnp.sqrt(float(fan_in))
        W = jax.random.uniform(kw, (fan_out, fan_in), jnp.float32, -bound, bound)
        b = jax.random.uniform(kb, (fan_out,), jnp.float32, -bound, bound)
        params.append((W, b))
    return params


def zdec_reference(x, params):
    h = x
    for i, (W, b) in enumerate(params):
        h = h @ W.T + b
        if i < len(params) - 1:
            h = jnp.where(h > 0, h, NEG_SLOPE * h)
        else:
            h = jax.nn.sigmoid(h)
    return h


if __name__ == "__main__":
    key = jax.random.PRNGKey(0)
    key, kx = jax.random.split(key)

    # Small but non-trivial batch: pads to 256 lanes -> 2 grid steps of 128.
    B = 200
    x = jax.random.normal(kx, (B, HIDDEN_DIMS[0]), dtype=jnp.float32)
    params = init_params(key)
    slab = pack_params(params)

    out = jax.block_until_ready(zdec_block(x, slab))

    ref = zdec_reference(x, params)
    assert out.shape == (B, HIDDEN_DIMS[-1]), out.shape
    assert jnp.allclose(out, ref, atol=1e-5, rtol=1e-5), (
        f"max abs err: {jnp.max(jnp.abs(out - ref))}")

    print("KERNEL_OK")
</pallas_src>

<mosaic_0001>
module attributes {stable_mosaic.version = 11 : i64} {
  func.func @zdec_kernel(%arg0: i32, %arg1: memref<8x128xf32, #tpu.memory_space<vmem>>, %arg2: memref<104x128xf32, #tpu.memory_space<vmem>>, %arg3: memref<16x128xf32, #tpu.memory_space<vmem>>) attributes {dimension_semantics = [#tpu.dimension_semantics<parallel>], iteration_bounds = array<i64: 2>, scalar_prefetch = 0 : i64, scratch_operands = 0 : i64, tpu.core_type = #tpu.core_type<tc>, window_params = [{transform_indices = @transform_0, window_bounds = array<i64: 8, 128>}, {pipeline_mode = #tpu.pipeline_mode<synchronous>, transform_indices = @transform_1, window_bounds = array<i64: 104, 128>}, {transform_indices = @transform_2, window_bounds = array<i64: 16, 128>}]} {
    %c0 = arith.constant 0 : index
    %c0_0 = arith.constant 0 : index
    %0 = vector.load %arg1[%c0, %c0_0] : memref<8x128xf32, #tpu.memory_space<vmem>>, vector<8x128xf32>
    %c0_1 = arith.constant 0 : index
    %c0_2 = arith.constant 0 : index
    %1 = vector.load %arg2[%c0_1, %c0_2] : memref<104x128xf32, #tpu.memory_space<vmem>>, vector<8x8xf32>
    %cst = arith.constant dense<0.000000e+00> : vector<8x128xf32>
    %2 = tpu.matmul %1, %0, %cst {dimension_numbers = #tpu.dot_dimension_numbers<[1], [0], [0], [1], [0, 0, 1, 1], [], []>} : vector<8x8xf32>, vector<8x128xf32>, vector<8x128xf32> -> vector<8x128xf32>
    %cst_3 = arith.constant 0.00999999977 : f32
    %3 = vector.broadcast %cst_3 : f32 to vector<8x128xf32>
    %4 = arith.mulf %3, %2 : vector<8x128xf32>
    %5 = arith.maximumf %2, %4 : vector<8x128xf32>
    %c8 = arith.constant 8 : index
    %c0_4 = arith.constant 0 : index
    %6 = vector.load %arg2[%c8, %c0_4] : memref<104x128xf32, #tpu.memory_space<vmem>>, vector<16x8xf32>
    %cst_5 = arith.constant dense<0.000000e+00> : vector<16x128xf32>
    %7 = tpu.matmul %6, %5, %cst_5 {dimension_numbers = #tpu.dot_dimension_numbers<[1], [0], [0], [1], [0, 0, 1, 1], [], []>} : vector<16x8xf32>, vector<8x128xf32>, vector<16x128xf32> -> vector<16x128xf32>
    %c8_6 = arith.constant 8 : index
    %c64 = arith.constant 64 : index
    %8 = vector.load %arg2[%c8_6, %c64] : memref<104x128xf32, #tpu.memory_space<vmem>>, vector<16x1xf32>
    %9 = vector.broadcast %8 : vector<16x1xf32> to vector<16x128xf32>
    %10 = arith.addf %7, %9 : vector<16x128xf32>
    %cst_7 = arith.constant 0.00999999977 : f32
    %11 = vector.broadcast %cst_7 : f32 to vector<16x128xf32>
    %12 = arith.mulf %11, %10 : vector<16x128xf32>
    %13 = arith.maximumf %10, %12 : vector<16x128xf32>
    %c24 = arith.constant 24 : index
    %c0_8 = arith.constant 0 : index
    %14 = vector.load %arg2[%c24, %c0_8] : memref<104x128xf32, #tpu.memory_space<vmem>>, vector<64x16xf32>
    %cst_9 = arith.constant dense<0.000000e+00> : vector<64x128xf32>
    %15 = tpu.matmul %14, %13, %cst_9 {dimension_numbers = #tpu.dot_dimension_numbers<[1], [0], [0], [1], [0, 0, 1, 1], [], []>} : vector<64x16xf32>, vector<16x128xf32>, vector<64x128xf32> -> vector<64x128xf32>
    %c24_10 = arith.constant 24 : index
    %c64_11 = arith.constant 64 : index
    %16 = vector.load %arg2[%c24_10, %c64_11] : memref<104x128xf32, #tpu.memory_space<vmem>>, vector<64x1xf32>
    %17 = vector.broadcast %16 : vector<64x1xf32> to vector<64x128xf32>
    %18 = arith.addf %15, %17 : vector<64x128xf32>
    %cst_12 = arith.constant 0.00999999977 : f32
    %19 = vector.broadcast %cst_12 : f32 to vector<64x128xf32>
    %20 = arith.mulf %19, %18 : vector<64x128xf32>
    %21 = arith.maximumf %18, %20 : vector<64x128xf32>
    %c88 = arith.constant 88 : index
    %c0_13 = arith.constant 0 : index
    %22 = vector.load %arg2[%c88, %c0_13] : memref<104x128xf32, #tpu.memory_space<vmem>>, vector<16x64xf32>
    %cst_14 = arith.constant dense<0.000000e+00> : vector<16x128xf32>
    %23 = tpu.matmul %22, %21, %cst_14 {dimension_numbers = #tpu.dot_dimension_numbers<[1], [0], [0], [1], [0, 0, 1, 1], [], []>} : vector<16x64xf32>, vector<64x128xf32>, vector<16x128xf32> -> vector<16x128xf32>
    %c88_15 = arith.constant 88 : index
    %c64_16 = arith.constant 64 : index
    %24 = vector.load %arg2[%c88_15, %c64_16] : memref<104x128xf32, #tpu.memory_space<vmem>>, vector<16x1xf32>
    %25 = vector.broadcast %24 : vector<16x1xf32> to vector<16x128xf32>
    %26 = arith.addf %23, %25 : vector<16x128xf32>
    %27 = arith.negf %26 : vector<16x128xf32>
    %28 = math.exp %27 : vector<16x128xf32>
    %cst_17 = arith.constant 1.000000e+00 : f32
    %29 = vector.broadcast %cst_17 : f32 to vector<16x128xf32>
    %30 = arith.addf %29, %28 : vector<16x128xf32>
    %31 = arith.divf %29, %30 : vector<16x128xf32>
    %c0_18 = arith.constant 0 : index
    %c0_19 = arith.constant 0 : index
    %32 = vector.load %arg3[%c0_18, %c0_19] : memref<16x128xf32, #tpu.memory_space<vmem>>, vector<16x128xf32>
    tpu.vector_store %arg3[%c0_18, %c0_19], %31 {strides = array<i32>} : memref<16x128xf32, #tpu.memory_space<vmem>>, vector<16x128xf32>,
    return
  }
  func.func @transform_0(%arg0: i32) -> (i32, i32) {
    %c0_i32 = arith.constant 0 : i32
    %c0_i32_0 = arith.constant 0 : i32
    return %c0_i32, %arg0 : i32, i32
  }
  func.func @transform_1(%arg0: i32) -> (i32, i32) {
    %c0_i32 = arith.constant 0 : i32
    %c0_i32_0 = arith.constant 0 : i32
    %c0_i32_1 = arith.constant 0 : i32
    return %c0_i32, %c0_i32_0 : i32, i32
  }
  func.func @transform_2(%arg0: i32) -> (i32, i32) {
    %c0_i32 = arith.constant 0 : i32
    %c0_i32_0 = arith.constant 0 : i32
    return %c0_i32, %arg0 : i32, i32
  }
}

</mosaic_0001>

<llo_original>
// kernel: zdec_block.1
$region0: #{zdec_block.1}
  #allocation0 [shape = 'u32[]', space=smem, size = 0x4, offset = 0x4, fixed_abs, tag = 'smem constant byte address 0x4 - core index']
  #allocation1 [shape = 'u32[144,128]{1,0:T(1,128)}', space=vmem, size = 0x12000, scoped, tag = 'internal scratch']
  %s0 = inlined_call_operand.vmem [shape: f32[8,256], index: 0, kind: input, shape index: {}]
  %s1 = inlined_call_operand.hbm [shape: f32[104,128], index: 1, kind: input, shape index: {}]
  %s2 = inlined_call_operand.vmem [shape: f32[16,256], index: 2, kind: output, shape index: {}]
  %s3 = sld [smem:[#allocation0]]
  $region79: #{zdec_block.1} parent=0
    _
  %s5 = ssub.s32 1, %s3
  %s6 = scalar_select 0, %s5, %s3
  $region1: #{zdec_block.1} parent=0
    #allocation2 [shape = 'u8[53248]{0}', space=vmem, size = 0xd000, scoped, tag = 'input window, operand 1, single buffered']
    #allocation3 [shape = 's32[2]{0}', space=sflag, size = 0x8, scoped, tag = 'scoped memory for zdec_block.1']
    #allocation4 [shape = 'u8[16384]{0}', space=vmem, size = 0x4000, scoped, tag = 'output window, operand 0']
    %7 = vsyncpa [#allocation3], 0
    loop: start=0, step=1, limit=4
    $region2: #{zdec_block.1} parent=1 // loop_pre_header
      _
    $region3: #{zdec_block.1} parent=1 // loop_header
      %s9 = sphi 0, %s13
      %p10 = scmp.ge.s32.totalorder %s9, 4
      %s19 = sphi 0, %s21
      %s22 = sphi 0, %s19
      %s23 = sphi 0, %s22
      %s39 = sphi 0, %s23
      %s43 = sphi 0, %s43
      %s45 = sphi 0, %s43
      %s46 = sphi 0, %s45
      %s60 = sphi 0, %s46
      %s66 = sphi 0, %s68
      %s69 = sphi 0, %s66
      %s70 = sphi 0, %s69
      %s86 = sphi 0, %s70
    $region4: #{zdec_block.1} parent=1 // loop_header_branch
      %12 = sbr.rel (%p10) target = $region8
    $region5: #{zdec_block.1} parent=1 // loop_body
      %s14 = ssub.s32 %s9, 1
      %s15 = ssub.s32 %s9, 2
      %s16 = sadd.s32 %s9, 1
      %s17 = ssub.s32 %s9, %s16
      %p18 = scmp.eq.s32.totalorder %s17, 0
      %s20 = sadd.s32 %s19, 1
      %s21 = scalar_select %p18, %s19, %s20
      %p24 = pneg %p18
      %p25 = scmp.eq.s32.totalorder %s9, 1
      %p26 = por %p24, %p25
      %p27 = scmp.ne.s32.totalorder %s19, %s22
      %p28 = scmp.eq.s32.totalorder %s9, 0
      %p29 = por %p27, %p28
      %p30 = scmp.ne.s32.totalorder %s19, %s22
      %p31 = scmp.eq.s32.totalorder %s14, 1
      %p32 = por %p30, %p31
      %p33 = scmp.ne.s32.totalorder %s22, %s23
      %p34 = scmp.eq.s32.totalorder %s14, 0
      %p35 = por %p33, %p34
      %p36 = scmp.ne.s32.totalorder %s22, %s23
      %p37 = scmp.eq.s32.totalorder %s15, 1
      %p38 = por %p36, %p37
      %p40 = scmp.ne.s32.totalorder %s23, %s39
      %p41 = scmp.eq.s32.totalorder %s15, 0
      %p42 = por %p40, %p41
      %s44 = sadd.s32 %s43, 1
      %p47 = scmp.eq.s32.totalorder %s9, 1
      %p48 = scmp.ne.s32.totalorder %s43, %s45
      %p49 = scmp.eq.s32.totalorder %s9, 0
      %p50 = por %p48, %p49
      %p51 = scmp.ne.s32.totalorder %s43, %s45
      %p52 = scmp.eq.s32.totalorder %s14, 1
      %p53 = por %p51, %p52
      %p54 = scmp.ne.s32.totalorder %s45, %s46
      %p55 = scmp.eq.s32.totalorder %s14, 0
      %p56 = por %p54, %p55
      %p57 = scmp.ne.s32.totalorder %s45, %s46
      %p58 = scmp.eq.s32.totalorder %s15, 1
      %p59 = por %p57, %p58
      %p61 = scmp.ne.s32.totalorder %s46, %s60
      %p62 = scmp.eq.s32.totalorder %s15, 0
      %p63 = por %p61, %p62
      %s64 = ssub.s32 %s9, %s16
      %p65 = scmp.eq.s32.totalorder %s64, 0
      %s67 = sadd.s32 %s66, 1
      %s68 = scalar_select %p65, %s66, %s67
      %p71 = pneg %p65
      %p72 = scmp.eq.s32.totalorder %s9, 1
      %p73 = por %p71, %p72
      %p74 = scmp.ne.s32.totalorder %s66, %s69
      %p75 = scmp.eq.s32.totalorder %s9, 0
      %p76 = por %p74, %p75
      %p77 = scmp.ne.s32.totalorder %s66, %s69
      %p78 = scmp.eq.s32.totalorder %s14, 1
      %p79 = por %p77, %p78
      %p80 = scmp.ne.s32.totalorder %s69, %s70
      %p81 = scmp.eq.s32.totalorder %s14, 0
      %p82 = por %p80, %p81
      %p83 = scmp.ne.s32.totalorder %s69, %s70
      %p84 = scmp.eq.s32.totalorder %s15, 1
      %p85 = por %p83, %p84
      %p87 = scmp.ne.s32.totalorder %s70, %s86
      %p88 = scmp.eq.s32.totalorder %s15, 0
      %p89 = por %p87, %p88
      %p90 = scmp.le.s32.totalorder 1, %s9
      %p91 = scmp.lt.s32.totalorder %s9, 3
      %p92 = pnand %p90, %p91
      %p93 = pneg %p92
      // Predicated region
      $region9: #{zdec_block.1} parent=5 // pred_check
        _
      $region10: #{zdec_block.1} parent=5 // pred_check_branch
        %95 = sbr.rel (%p92) target = $region12
      $region11: #{zdec_block.1} parent=5 // pred_region
        %s96 = ssub.s32 %s9, 1
        // Predicated region
        $region13: #{zdec_block.1} parent=11 // pred_check
          %p97 = pneg %p56
        $region14: #{zdec_block.1} parent=11 // pred_check_branch
          %99 = sbr.rel (%p97) target = $region16
        $region15: #{zdec_block.1} parent=11 // pred_region
          %s101 = ssub.s32 1664, 1664
          %102 = vsyncadd [#allocation3], %s101
          %s103 = sshll.u32 [#allocation2], 4
          %s104 = int_to_ptr.vmem [resolvable:$true] %s103
          %109 = dma.hbm_to_vmem [thread:$0]  %s1, 1664, %s104, [#allocation3], 128, 128, 8
        $region16: #{zdec_block.1} parent=11 // pred_fallthru
          _
      $region12: #{zdec_block.1} parent=5 // pred_fallthru
        _
      %p110 = scmp.lt.s32.totalorder %s9, 2
      // Predicated region
      $region17: #{zdec_block.1} parent=5 // pred_check
        %p111 = pneg %p110
      $region18: #{zdec_block.1} parent=5 // pred_check_branch
        %113 = sbr.rel (%p111) target = $region20
      $region19: #{zdec_block.1} parent=5 // pred_region
        // Predicated region
        $region21: #{zdec_block.1} parent=19 // pred_check
          %p114 = pneg %p29
        $region22: #{zdec_block.1} parent=19 // pred_check_branch
          %116 = sbr.rel (%p114) target = $region24
        $region23: #{zdec_block.1} parent=19 // pred_region
          %p117 = scmp.lt.s32.totalorder %s9, 1
          %s118 = scalar_select %p117, %s9, 1
          %s119 = smul.addr %s118, 8
          %s120 = scalar_lea.vmem %s0, %s119
        $region24: #{zdec_block.1} parent=19 // pred_fallthru
          _
      $region20: #{zdec_block.1} parent=5 // pred_fallthru
        _
      %p121 = scmp.le.s32.totalorder 1, %s9
      %p122 = scmp.lt.s32.totalorder %s9, 3
      %p123 = pnand %p121, %p122
      %p124 = pneg %p123
      // Predicated region
      $region25: #{zdec_block.1} parent=5 // pred_check
        _
      $region26: #{zdec_block.1} parent=5 // pred_check_branch
        %126 = sbr.rel (%p123) target = $region28
      $region27: #{zdec_block.1} parent=5 // pred_region
        %s127 = ssub.s32 %s9, 1
        // Predicated region
        $region29: #{zdec_block.1} parent=27 // pred_check
          %p128 = pneg %p56
        $region30: #{zdec_block.1} parent=27 // pred_check_branch
          %130 = sbr.rel (%p128) target = $region32
        $region31: #{zdec_block.1} parent=27 // pred_region
          %131 = dma.done [#allocation3], 1664
        $region32: #{zdec_block.1} parent=27 // pred_fallthru
          _
        %p132 = scmp.lt.s32.totalorder %s14, 1
        %s133 = scalar_select %p132, %s14, 1
        %s134 = smul.addr %s133, 8
        %s135 = scalar_lea.vmem %s0, %s134
        %p136 = pneg %p35
        %p137 = pneg %p32
        %p138 = pneg %p56
        %p139 = pneg %p53
        %p140 = pneg %p82
        %p141 = pneg %p79
        %s142 = sand.u32 %s69, 1
        %s143 = sand.u32 %s69, 1
        %s144 = smul.addr %s143, 16
        %s145 = scalar_lea.vmem [#allocation4], %s144
        %p146 = scmp.lt.s32.totalorder %s14, 1
        %s147 = scalar_select %p146, %s14, 1
        %s148 = smul.addr %s147, 8
        %s149 = scalar_lea.vmem %s0, %s148
        %v150 = vld [vmem:[%s149] sm:$0xff]
        %v151 = vld [vmem:[#allocation2] sm:$0xff]
        %vm152 = vcmask 64512
        %v154 = vsel %vm152, %v151, 0
        %156 = vmatprep.subr.mxu0 0.0
        %157 = vmatpush1.msra.mxu0 0.0
        %158 = vmatprep.subr.mxu0 0.0
        %159 = vmatpush1.msra.mxu0 0.0
        %160 = vmatprep.subr.mxu0 0.0
        %161 = vmatpush1.msra.mxu0 0.0
        %162 = vmatprep.subr.mxu0 0.0
        %163 = vmatpush1.msra.mxu0 0.0
        %164 = vmatprep.subr.mxu0 0.0
        %165 = vmatpush1.msra.mxu0 0.0
        %166 = vmatprep.subr.mxu0 0.0
        %167 = vmatpush1.msra.mxu0 0.0
        %168 = vmatprep.subr.mxu0 0.0
        %169 = vmatpush1.msra.mxu0 0.0
        %170 = vmatprep.subr.mxu0 0.0
        %171 = vmatpush1.msra.mxu0 0.0
        %172 = vmatprep.subr.mxu0 0.0
        %173 = vmatpush1.msra.mxu0 0.0
        %174 = vmatprep.subr.mxu0 0.0
        %175 = vmatpush1.msra.mxu0 0.0
        %176 = vmatprep.subr.mxu0 0.0
        %177 = vmatpush1.msra.mxu0 0.0
        %178 = vmatprep.subr.mxu0 0.0
        %179 = vmatpush1.msra.mxu0 0.0
        %180 = vmatprep.subr.mxu0 0.0
        %181 = vmatpush1.msra.mxu0 0.0
        %182 = vmatprep.subr.mxu0 0.0
        %183 = vmatpush1.msra.mxu0 0.0
        %184 = vmatprep.subr.mxu0 0.0
        %185 = vmatpush1.msra.mxu0 0.0
        %186 = vmatprep.subr.mxu0 0.0
        %187 = vmatpush1.msra.mxu0 %v150
        %188 = vmatprep.subr.mxu0 0.0
        %189 = vmatpush2.msra.mxu0 0.0
        %190 = vmatprep.subr.mxu0 0.0
        %191 = vmatpush2.msra.mxu0 0.0
        %192 = vmatprep.subr.mxu0 0.0
        %193 = vmatpush2.msra.mxu0 0.0
        %194 = vmatprep.subr.mxu0 0.0
        %195 = vmatpush2.msra.mxu0 0.0
        %196 = vmatprep.subr.mxu0 0.0
        %197 = vmatpush2.msra.mxu0 0.0
        %198 = vmatprep.subr.mxu0 0.0
        %199 = vmatpush2.msra.mxu0 0.0
        %200 = vmatprep.subr.mxu0 0.0
        %201 = vmatpush2.msra.mxu0 0.0
        %202 = vmatprep.subr.mxu0 0.0
        %203 = vmatpush2.msra.mxu0 0.0
        %204 = vmatprep.subr.mxu0 0.0
        %205 = vmatpush2.msra.mxu0 0.0
        %206 = vmatprep.subr.mxu0 0.0
        %207 = vmatpush2.msra.mxu0 0.0
        %208 = vmatprep.subr.mxu0 0.0
        %209 = vmatpush2.msra.mxu0 0.0
        %210 = vmatprep.subr.mxu0 0.0
        %211 = vmatpush2.msra.mxu0 0.0
        %212 = vmatprep.subr.mxu0 0.0
        %213 = vmatpush2.msra.mxu0 0.0
        %214 = vmatprep.subr.mxu0 0.0
        %215 = vmatpush2.msra.mxu0 0.0
        %216 = vmatprep.subr.mxu0 0.0
        %217 = vmatpush2.msra.mxu0 0.0
        %218 = vmatprep.subr.mxu0 0.0
        %219 = vmatpush2.msra.mxu0 0.0
        %220 = vmatprep.mubr.f32.mxu0 0.0
        %221 = vmatmul.mubr.f32.gmra.mxu0 %v154
        %v222 = vpop.f32.mrf.mxu0
        %v223 = vadd.f32 0.0, %v222
        %v224 = vpop.f32.mrf.mxu0
        %225 = vdwg.mxu0
        %v226 = vmul.f32 %v223, 0.01
        %v227 = vmax.f32 %v223, %v226
        %v228 = vld [vmem:[#allocation2 + $0x8] sm:$0xff]
        %v229 = vld [vmem:[#allocation2 + $0x10] sm:$0xff]
        %231 = vset.pattern.permute.xlu0 64
        %232 = vperm.xlu0 %231, %v228
        %v233 = vpop.permute.xlu0 %232
        %236 = vset.pattern.permute.xlu0 64
        %237 = vperm.xlu0 %236, %v229
        %v238 = vpop.permute.xlu0 %237
        %v240 = vsel %vm152, %v228, 0
        %v242 = vsel %vm152, %v229, 0
        %244 = vmatprep.subr.mxu0 0.0
        %245 = vmatpush1.msra.mxu0 0.0
        %246 = vmatprep.subr.mxu0 0.0
        %247 = vmatpush1.msra.mxu0 0.0
        %248 = vmatprep.subr.mxu0 0.0
        %249 = vmatpush1.msra.mxu0 0.0
        %250 = vmatprep.subr.mxu0 0.0
        %251 = vmatpush1.msra.mxu0 0.0
        %252 = vmatprep.subr.mxu0 0.0
        %253 = vmatpush1.msra.mxu0 0.0
        %254 = vmatprep.subr.mxu0 0.0
        %255 = vmatpush1.msra.mxu0 0.0
        %256 = vmatprep.subr.mxu0 0.0
        %257 = vmatpush1.msra.mxu0 0.0
        %258 = vmatprep.subr.mxu0 0.0
        %259 = vmatpush1.msra.mxu0 0.0
        %260 = vmatprep.subr.mxu0 0.0
        %261 = vmatpush1.msra.mxu0 0.0
        %262 = vmatprep.subr.mxu0 0.0
        %263 = vmatpush1.msra.mxu0 0.0
        %264 = vmatprep.subr.mxu0 0.0
        %265 = vmatpush1.msra.mxu0 0.0
        %266 = vmatprep.subr.mxu0 0.0
        %267 = vmatpush1.msra.mxu0 0.0
        %268 = vmatprep.subr.mxu0 0.0
        %269 = vmatpush1.msra.mxu0 0.0
        %270 = vmatprep.subr.mxu0 0.0
        %271 = vmatpush1.msra.mxu0 0.0
        %272 = vmatprep.subr.mxu0 0.0
        %273 = vmatpush1.msra.mxu0 0.0
        %274 = vmatprep.subr.mxu0 0.0
        %275 = vmatpush1.msra.mxu0 %v227
        %276 = vmatprep.subr.mxu0 0.0
        %277 = vmatpush2.msra.mxu0 0.0
        %278 = vmatprep.subr.mxu0 0.0
        %279 = vmatpush2.msra.mxu0 0.0
        %280 = vmatprep.subr.mxu0 0.0
        %281 = vmatpush2.msra.mxu0 0.0
        %282 = vmatprep.subr.mxu0 0.0
        %283 = vmatpush2.msra.mxu0 0.0
        %284 = vmatprep.subr.mxu0 0.0
        %285 = vmatpush2.msra.mxu0 0.0
        %286 = vmatprep.subr.mxu0 0.0
        %287 = vmatpush2.msra.mxu0 0.0
        %288 = vmatprep.subr.mxu0 0.0
        %289 = vmatpush2.msra.mxu0 0.0
        %290 = vmatprep.subr.mxu0 0.0
        %291 = vmatpush2.msra.mxu0 0.0
        %292 = vmatprep.subr.mxu0 0.0
        %293 = vmatpush2.msra.mxu0 0.0
        %294 = vmatprep.subr.mxu0 0.0
        %295 = vmatpush2.msra.mxu0 0.0
        %296 = vmatprep.subr.mxu0 0.0
        %297 = vmatpush2.msra.mxu0 0.0
        %298 = vmatprep.subr.mxu0 0.0
        %299 = vmatpush2.msra.mxu0 0.0
        %300 = vmatprep.subr.mxu0 0.0
        %301 = vmatpush2.msra.mxu0 0.0
        %302 = vmatprep.subr.mxu0 0.0
        %303 = vmatpush2.msra.mxu0 0.0
        %304 = vmatprep.subr.mxu0 0.0
        %305 = vmatpush2.msra.mxu0 0.0
        %306 = vmatprep.subr.mxu0 0.0
        %307 = vmatpush2.msra.mxu0 0.0
        %308 = vmatprep.mubr.f32.mxu0 0.0
        %309 = vmatmul.mubr.f32.gmra.mxu0 %v240
        %v310 = vpop.f32.mrf.mxu0
        %v311 = vadd.f32 %v233, %v310
        %v312 = vpop.f32.mrf.mxu0
        %313 = vmatprep.mubr.f32.mxu0 0.0
        %314 = vmatmul.mubr.f32.gmra.mxu0 %v242
        %v315 = vpop.f32.mrf.mxu0
        %v316 = vadd.f32 %v238, %v315
        %v317 = vpop.f32.mrf.mxu0
        %318 = vdwg.mxu0
        %v319 = vmul.f32 %v311, 0.01
        %v320 = vmul.f32 %v316, 0.01
        %v321 = vmax.f32 %v311, %v319
        %v322 = vmax.f32 %v316, %v320
        %v323 = vld [vmem:[#allocation2 + $0x18] sm:$0xff]
        %v324 = vld [vmem:[#allocation2 + $0x20] sm:$0xff]
        %v325 = vld [vmem:[#allocation2 + $0x28] sm:$0xff]
        %v326 = vld [vmem:[#allocation2 + $0x30] sm:$0xff]
        %v327 = vld [vmem:[#allocation2 + $0x38] sm:$0xff]
        %v328 = vld [vmem:[#allocation2 + $0x40] sm:$0xff]
        %v329 = vld [vmem:[#allocation2 + $0x48] sm:$0xff]
        %v330 = vld [vmem:[#allocation2 + $0x50] sm:$0xff]
        %332 = vset.pattern.permute.xlu0 64
        %333 = vperm.xlu0 %332, %v323
        %v334 = vpop.permute.xlu0 %333
        %337 = vset.pattern.permute.xlu0 64
        %338 = vperm.xlu0 %337, %v324
        %v339 = vpop.permute.xlu0 %338
        %342 = vset.pattern.permute.xlu0 64
        %343 = vperm.xlu0 %342, %v325
        %v344 = vpop.permute.xlu0 %343
        %347 = vset.pattern.permute.xlu0 64
        %348 = vperm.xlu0 %347, %v326
        %v349 = vpop.permute.xlu0 %348
        %352 = vset.pattern.permute.xlu0 64
        %353 = vperm.xlu0 %352, %v327
        %v354 = vpop.permute.xlu0 %353
        %357 = vset.pattern.permute.xlu0 64
        %358 = vperm.xlu0 %357, %v328
        %v359 = vpop.permute.xlu0 %358
        %362 = vset.pattern.permute.xlu0 64
        %363 = vperm.xlu0 %362, %v329
        %v364 = vpop.permute.xlu0 %363
        %367 = vset.pattern.permute.xlu0 64
        %368 = vperm.xlu0 %367, %v330
        %v369 = vpop.permute.xlu0 %368
        %vm371 = vcmask 130048
        %v372 = vsel %vm371, %v323, 0
        %v374 = vsel %vm371, %v324, 0
        %v376 = vsel %vm371, %v325, 0
        %v378 = vsel %vm371, %v326, 0
        %v380 = vsel %vm371, %v327, 0
        %v382 = vsel %vm371, %v328, 0
        %v384 = vsel %vm371, %v329, 0
        %v386 = vsel %vm371, %v330, 0
        %388 = vmatprep.subr.mxu0 0.0
        %389 = vmatpush1.msra.mxu0 0.0
        %390 = vmatprep.subr.mxu0 0.0
        %391 = vmatpush1.msra.mxu0 0.0
        %392 = vmatprep.subr.mxu0 0.0
        %393 = vmatpush1.msra.mxu0 0.0
        %394 = vmatprep.subr.mxu0 0.0
        %395 = vmatpush1.msra.mxu0 0.0
        %396 = vmatprep.subr.mxu0 0.0
        %397 = vmatpush1.msra.mxu0 0.0
        %398 = vmatprep.subr.mxu0 0.0
        %399 = vmatpush1.msra.mxu0 0.0
        %400 = vmatprep.subr.mxu0 0.0
        %401 = vmatpush1.msra.mxu0 0.0
        %402 = vmatprep.subr.mxu0 0.0
        %403 = vmatpush1.msra.mxu0 0.0
        %404 = vmatprep.subr.mxu0 0.0
        %405 = vmatpush1.msra.mxu0 0.0
        %406 = vmatprep.subr.mxu0 0.0
        %407 = vmatpush1.msra.mxu0 0.0
        %408 = vmatprep.subr.mxu0 0.0
        %409 = vmatpush1.msra.mxu0 0.0
        %410 = vmatprep.subr.mxu0 0.0
        %411 = vmatpush1.msra.mxu0 0.0
        %412 = vmatprep.subr.mxu0 0.0
        %413 = vmatpush1.msra.mxu0 0.0
        %414 = vmatprep.subr.mxu0 0.0
        %415 = vmatpush1.msra.mxu0 0.0
        %416 = vmatprep.subr.mxu0 0.0
        %417 = vmatpush1.msra.mxu0 %v322
        %418 = vmatprep.subr.mxu0 0.0
        %419 = vmatpush1.msra.mxu0 %v321
        %420 = vmatprep.subr.mxu0 0.0
        %421 = vmatpush2.msra.mxu0 0.0
        %422 = vmatprep.subr.mxu0 0.0
        %423 = vmatpush2.msra.mxu0 0.0
        %424 = vmatprep.subr.mxu0 0.0
        %425 = vmatpush2.msra.mxu0 0.0
        %426 = vmatprep.subr.mxu0 0.0
        %427 = vmatpush2.msra.mxu0 0.0
        %428 = vmatprep.subr.mxu0 0.0
        %429 = vmatpush2.msra.mxu0 0.0
        %430 = vmatprep.subr.mxu0 0.0
        %431 = vmatpush2.msra.mxu0 0.0
        %432 = vmatprep.subr.mxu0 0.0
        %433 = vmatpush2.msra.mxu0 0.0
        %434 = vmatprep.subr.mxu0 0.0
        %435 = vmatpush2.msra.mxu0 0.0
        %436 = vmatprep.subr.mxu0 0.0
        %437 = vmatpush2.msra.mxu0 0.0
        %438 = vmatprep.subr.mxu0 0.0
        %439 = vmatpush2.msra.mxu0 0.0
        %440 = vmatprep.subr.mxu0 0.0
        %441 = vmatpush2.msra.mxu0 0.0
        %442 = vmatprep.subr.mxu0 0.0
        %443 = vmatpush2.msra.mxu0 0.0
        %444 = vmatprep.subr.mxu0 0.0
        %445 = vmatpush2.msra.mxu0 0.0
        %446 = vmatprep.subr.mxu0 0.0
        %447 = vmatpush2.msra.mxu0 0.0
        %448 = vmatprep.subr.mxu0 0.0
        %449 = vmatpush2.msra.mxu0 0.0
        %450 = vmatprep.subr.mxu0 0.0
        %451 = vmatpush2.msra.mxu0 0.0
        %452 = vmatprep.mubr.f32.mxu0 0.0
        %453 = vmatmul.mubr.f32.gmra.mxu0 %v372
        %v454 = vpop.f32.mrf.mxu0
        %v455 = vadd.f32 %v334, %v454
        %v456 = vpop.f32.mrf.mxu0
        %457 = vmatprep.mubr.f32.mxu0 0.0
        %458 = vmatmul.mubr.f32.gmra.mxu0 %v374
        %v459 = vpop.f32.mrf.mxu0
        %v460 = vadd.f32 %v339, %v459
        %v461 = vpop.f32.mrf.mxu0
        %462 = vmatprep.mubr.f32.mxu0 0.0
        %463 = vmatmul.mubr.f32.gmra.mxu0 %v376
        %v464 = vpop.f32.mrf.mxu0
        %v465 = vadd.f32 %v344, %v464
        %v466 = vpop.f32.mrf.mxu0
        %467 = vmatprep.mubr.f32.mxu0 0.0
        %468 = vmatmul.mubr.f32.gmra.mxu0 %v378
        %v469 = vpop.f32.mrf.mxu0
        %v470 = vadd.f32 %v349, %v469
        %v471 = vpop.f32.mrf.mxu0
        %472 = vmatprep.mubr.f32.mxu0 0.0
        %473 = vmatmul.mubr.f32.gmra.mxu0 %v380
        %v474 = vpop.f32.mrf.mxu0
        %v475 = vadd.f32 %v354, %v474
        %v476 = vpop.f32.mrf.mxu0
        %477 = vmatprep.mubr.f32.mxu0 0.0
        %478 = vmatmul.mubr.f32.gmra.mxu0 %v382
        %v479 = vpop.f32.mrf.mxu0
        %v480 = vadd.f32 %v359, %v479
        %v481 = vpop.f32.mrf.mxu0
        %482 = vmatprep.mubr.f32.mxu0 0.0
        %483 = vmatmul.mubr.f32.gmra.mxu0 %v384
        %v484 = vpop.f32.mrf.mxu0
        %v485 = vadd.f32 %v364, %v484
        %v486 = vpop.f32.mrf.mxu0
        %487 = vmatprep.mubr.f32.mxu0 0.0
        %488 = vmatmul.mubr.f32.gmra.mxu0 %v386
        %v489 = vpop.f32.mrf.mxu0
        %v490 = vadd.f32 %v369, %v489
        %v491 = vpop.f32.mrf.mxu0
        %492 = vdwg.mxu0
        %v493 = vmul.f32 %v455, 0.01
        %v494 = vmul.f32 %v460, 0.01
        %v495 = vmul.f32 %v465, 0.01
        %v496 = vmul.f32 %v470, 0.01
        %v497 = vmul.f32 %v475, 0.01
        %v498 = vmul.f32 %v480, 0.01
        %v499 = vmul.f32 %v485, 0.01
        %v500 = vmul.f32 %v490, 0.01
        %v501 = vmax.f32 %v455, %v493
        %v502 = vmax.f32 %v460, %v494
        %v503 = vmax.f32 %v465, %v495
        %v504 = vmax.f32 %v470, %v496
        %v505 = vmax.f32 %v475, %v497
        %v506 = vmax.f32 %v480, %v498
        %v507 = vmax.f32 %v485, %v499
        %v508 = vmax.f32 %v490, %v500
        %v509 = vld [vmem:[#allocation2 + $0x58] sm:$0xff]
        %v510 = vld [vmem:[#allocation2 + $0x60] sm:$0xff]
        %512 = vset.pattern.permute.xlu0 64
        %513 = vperm.xlu0 %512, %v509
        %v514 = vpop.permute.xlu0 %513
        %517 = vset.pattern.permute.xlu0 64
        %518 = vperm.xlu0 %517, %v510
        %v519 = vpop.permute.xlu0 %518
        %vm521 = vcmask 523264
        %v522 = vsel %vm521, %v509, 0
        %v524 = vsel %vm521, %v510, 0
        %526 = vmatprep.subr.mxu0 0.0
        %527 = vmatpush1.msra.mxu0 0.0
        %528 = vmatprep.subr.mxu0 0.0
        %529 = vmatpush1.msra.mxu0 0.0
        %530 = vmatprep.subr.mxu0 0.0
        %531 = vmatpush1.msra.mxu0 0.0
        %532 = vmatprep.subr.mxu0 0.0
        %533 = vmatpush1.msra.mxu0 0.0
        %534 = vmatprep.subr.mxu0 0.0
        %535 = vmatpush1.msra.mxu0 0.0
        %536 = vmatprep.subr.mxu0 0.0
        %537 = vmatpush1.msra.mxu0 0.0
        %538 = vmatprep.subr.mxu0 0.0
        %539 = vmatpush1.msra.mxu0 0.0
        %540 = vmatprep.subr.mxu0 0.0
        %541 = vmatpush1.msra.mxu0 0.0
        %542 = vmatprep.subr.mxu0 0.0
        %543 = vmatpush1.msra.mxu0 %v508
        %544 = vmatprep.subr.mxu0 0.0
        %545 = vmatpush1.msra.mxu0 %v507
        %546 = vmatprep.subr.mxu0 0.0
        %547 = vmatpush1.msra.mxu0 %v506
        %548 = vmatprep.subr.mxu0 0.0
        %549 = vmatpush1.msra.mxu0 %v505
        %550 = vmatprep.subr.mxu0 0.0
        %551 = vmatpush1.msra.mxu0 %v504
        %552 = vmatprep.subr.mxu0 0.0
        %553 = vmatpush1.msra.mxu0 %v503
        %554 = vmatprep.subr.mxu0 0.0
        %555 = vmatpush1.msra.mxu0 %v502
        %556 = vmatprep.subr.mxu0 0.0
        %557 = vmatpush1.msra.mxu0 %v501
        %558 = vmatprep.subr.mxu0 0.0
        %559 = vmatpush2.msra.mxu0 0.0
        %560 = vmatprep.subr.mxu0 0.0
        %561 = vmatpush2.msra.mxu0 0.0
        %562 = vmatprep.subr.mxu0 0.0
        %563 = vmatpush2.msra.mxu0 0.0
        %564 = vmatprep.subr.mxu0 0.0
        %565 = vmatpush2.msra.mxu0 0.0
        %566 = vmatprep.subr.mxu0 0.0
        %567 = vmatpush2.msra.mxu0 0.0
        %568 = vmatprep.subr.mxu0 0.0
        %569 = vmatpush2.msra.mxu0 0.0
        %570 = vmatprep.subr.mxu0 0.0
        %571 = vmatpush2.msra.mxu0 0.0
        %572 = vmatprep.subr.mxu0 0.0
        %573 = vmatpush2.msra.mxu0 0.0
        %574 = vmatprep.subr.mxu0 0.0
        %575 = vmatpush2.msra.mxu0 0.0
        %576 = vmatprep.subr.mxu0 0.0
        %577 = vmatpush2.msra.mxu0 0.0
        %578 = vmatprep.subr.mxu0 0.0
        %579 = vmatpush2.msra.mxu0 0.0
        %580 = vmatprep.subr.mxu0 0.0
        %581 = vmatpush2.msra.mxu0 0.0
        %582 = vmatprep.subr.mxu0 0.0
        %583 = vmatpush2.msra.mxu0 0.0
        %584 = vmatprep.subr.mxu0 0.0
        %585 = vmatpush2.msra.mxu0 0.0
        %586 = vmatprep.subr.mxu0 0.0
        %587 = vmatpush2.msra.mxu0 0.0
        %588 = vmatprep.subr.mxu0 0.0
        %589 = vmatpush2.msra.mxu0 0.0
        %590 = vmatprep.mubr.f32.mxu0 0.0
        %591 = vmatmul.mubr.f32.gmra.mxu0 %v522
        %v592 = vpop.f32.mrf.mxu0
        %v593 = vadd.f32 %v514, %v592
        %v594 = vpop.f32.mrf.mxu0
        %595 = vmatprep.mubr.f32.mxu0 0.0
        %596 = vmatmul.mubr.f32.gmra.mxu0 %v524
        %v597 = vpop.f32.mrf.mxu0
        %v598 = vadd.f32 %v519, %v597
        %v599 = vpop.f32.mrf.mxu0
        %600 = vdwg.mxu0
        %v601 = vxor.u32 %v593, 2147483648
        %v602 = vxor.u32 %v598, 2147483648
        %v603 = vmul.f32 %v601, 1.442695
        %v604 = vpow.pop %v603
        %v605 = vmul.f32 %v602, 1.442695
        %v606 = vpow.pop %v605
        %v607 = vadd.f32 %v604, 1.0
        %v608 = vadd.f32 %v606, 1.0
        %v609 = vrcp.pop %v607
        %v610 = vmul.f32 1.0, %v609
        %v611 = vrcp.pop %v608
        %v612 = vmul.f32 1.0, %v611
        %613 = vst [vmem:[%s145] sm:$0xff] %v610
        %614 = vst [vmem:[%s145 + $0x8] sm:$0xff] %v612
        %s615 = sand.u32 %s69, 1
        %s616 = sand.u32 %s69, 1
        %s617 = smul.addr %s616, 16
        %s618 = scalar_lea.vmem [#allocation4], %s617
        // Predicated region
        $region33: #{zdec_block.1} parent=27 // pred_check
          %p619 = pneg %p79
        $region34: #{zdec_block.1} parent=27 // pred_check_branch
          %621 = sbr.rel (%p619) target = $region36
        $region35: #{zdec_block.1} parent=27 // pred_region
          %s622 = smul.addr %s14, 8
          %s623 = scalar_lea.vmem %s2, %s622
          // Predicated region
          $region37: #{zdec_block.1} parent=35 // pred_check
            _
          $region38: #{zdec_block.1} parent=35 // pred_check_branch
            %625 = sbr.rel (0) target = $region40
          $region39: #{zdec_block.1} parent=35 // pred_region
            // Predicated region
            $region41: #{zdec_block.1} parent=39 // pred_check
              _
            $region42: #{zdec_block.1} parent=39 // pred_check_branch
              %627 = sbr.rel (0) target = $region44
            $region43: #{zdec_block.1} parent=39 // pred_region
              // Predicated region
              $region56: #{zdec_block.1} parent=43 // pred_check
                _
              $region57: #{zdec_block.1} parent=43 // pred_check_branch
                %645 = sbr.rel (0) target = $region59
              $region58: #{zdec_block.1} parent=43 // pred_region
                loop: start=0, step=1, limit=1
                $region60: #{zdec_block.1} parent=58 // loop_pre_header
                  _
                $region61: #{zdec_block.1} parent=58 // loop_header
                  %s647 = sphi 0, %s651
                  %p648 = scmp.ge.s32.totalorder %s647, 1
                  %s652 = sphi %s618, %s618
                  %s653 = sphi %s623, %s623
                $region62: #{zdec_block.1} parent=58 // loop_header_branch
                  %650 = sbr.rel (%p648) target = $region66
                $region63: #{zdec_block.1} parent=58 // loop_body
                  %v654 = vld [vmem:[%s652] sm:$0xff]
                  %655 = vst [vmem:[%s653] sm:$0xff] %v654
                  %v656 = vld [vmem:[%s652 + $0x8] sm:$0xff]
                  %657 = vst [vmem:[%s653 + $0x10] sm:$0xff] %v656
                $region64: #{zdec_block.1} parent=58 // loop_footer
                  %s651 = sadd.s32 1, %s647
                $region65: #{zdec_block.1} parent=58 // loop_footer_branch
                  %646 = sbr.rel target = $region61
                $region66: #{zdec_block.1} parent=58 // loop_exit
                  _
              $region59: #{zdec_block.1} parent=43 // pred_fallthru
                _
              // Predicated region
              $region67: #{zdec_block.1} parent=43 // pred_check
                _
              $region68: #{zdec_block.1} parent=43 // pred_check_branch
                %659 = sbr.rel target = $region70
              $region69: #{zdec_block.1} parent=43 // pred_region
                _
              $region70: #{zdec_block.1} parent=43 // pred_fallthru
                _
            $region44: #{zdec_block.1} parent=39 // pred_fallthru
              _
            // Predicated region
            $region45: #{zdec_block.1} parent=39 // pred_check
              _
            $region46: #{zdec_block.1} parent=39 // pred_check_branch
              %629 = sbr.rel target = $region48
            $region47: #{zdec_block.1} parent=39 // pred_region
              %s631 = ssub.s32 256, 1
              loop: start=0, step=1, limit=1
              $region49: #{zdec_block.1} parent=47 // loop_pre_header
                _
              $region50: #{zdec_block.1} parent=47 // loop_header
                %s633 = sphi 0, %s637
                %p634 = scmp.ge.s32.totalorder %s633, 1
                %s638 = sphi %s618, %s618
                %s639 = sphi %s623, %s623
              $region51: #{zdec_block.1} parent=47 // loop_header_branch
                %636 = sbr.rel (%p634) target = $region55
              $region52: #{zdec_block.1} parent=47 // loop_body
                %v640 = vld [vmem:[%s638] sm:%s631]
                %641 = vst [vmem:[%s639] sm:%s631] %v640
                %v642 = vld [vmem:[%s638 + $0x8] sm:%s631]
                %643 = vst [vmem:[%s639 + $0x10] sm:%s631] %v642
              $region53: #{zdec_block.1} parent=47 // loop_footer
                %s637 = sadd.s32 1, %s633
              $region54: #{zdec_block.1} parent=47 // loop_footer_branch
                %632 = sbr.rel target = $region50
              $region55: #{zdec_block.1} parent=47 // loop_exit
                _
            $region48: #{zdec_block.1} parent=39 // pred_fallthru
              _
          $region40: #{zdec_block.1} parent=35 // pred_fallthru
            _
          %660 = vnop
        $region36: #{zdec_block.1} parent=27 // pred_fallthru
          _
      $region28: #{zdec_block.1} parent=5 // pred_fallthru
        _
      %p661 = scmp.le.s32.totalorder 2, %s9
      // Predicated region
      $region71: #{zdec_block.1} parent=5 // pred_check
        %p662 = pneg %p661
      $region72: #{zdec_block.1} parent=5 // pred_check_branch
        %664 = sbr.rel (%p662) target = $region74
      $region73: #{zdec_block.1} parent=5 // pred_region
        %s665 = ssub.s32 %s9, 2
        // Predicated region
        $region75: #{zdec_block.1} parent=73 // pred_check
          %p666 = pneg %p85
        $region76: #{zdec_block.1} parent=73 // pred_check_branch
          %668 = sbr.rel (%p666) target = $region78
        $region77: #{zdec_block.1} parent=73 // pred_region
          %s669 = sand.u32 %s70, 1
          %s670 = sand.u32 %s70, 1
          %s671 = smul.addr %s670, 16
          %s672 = scalar_lea.vmem [#allocation4], %s671
        $region78: #{zdec_block.1} parent=73 // pred_fallthru
          _
      $region74: #{zdec_block.1} parent=5 // pred_fallthru
        _
    $region6: #{zdec_block.1} parent=1 // loop_footer
      %s13 = sadd.s32 1, %s9
    $region7: #{zdec_block.1} parent=1 // loop_footer_branch
      %8 = sbr.rel target = $region3
    $region8: #{zdec_block.1} parent=1 // loop_exit
      _
    %673 = vsyncpa [#allocation3], 1
    %s674 = scalar_lea.sflag [#allocation3], 1
    %675 = vsyncpa %s674, 1

</llo_original>
